<compile_context>
chip_gen: v5e
topology: v5e:2x2
jax: 0.10.0
libtpu: 0.0.40
codegen_flags: <defaults>
</compile_context>

<pallas_src>
import functools
import math

import jax
import jax.numpy as jnp
from jax import lax
from jax.experimental import pallas as pl
from jax.experimental.pallas import tpu as pltpu


_NEG_INF = float(jnp.finfo(jnp.float32).min)
# Safe on every generation (default scoped limit; well within v7x's 64 MiB).
_VMEM_LIMIT = 32 * 1024 * 1024


def _pick_tile(dim, preferred):
    """Largest preferred tile that divides `dim`; else the full dim (always legal)."""
    for t in preferred:
        if dim % t == 0:
            return t
    return dim


# --------------------------------------------------------------------------
# Stage 1: fused QKV projection (bf16 MXU operands, f32 accumulation)
# --------------------------------------------------------------------------
def _qkv_proj_kernel(x_ref, wq_ref, wk_ref, wv_ref, q_ref, k_ref, v_ref):
    x = x_ref[...]  # (tm, d_in) bf16
    q_ref[...] = jnp.dot(x, wq_ref[...],
                         preferred_element_type=jnp.float32).astype(q_ref.dtype)
    k_ref[...] = jnp.dot(x, wk_ref[...],
                         preferred_element_type=jnp.float32).astype(k_ref.dtype)
    v_ref[...] = jnp.dot(x, wv_ref[...],
                         preferred_element_type=jnp.float32).astype(v_ref.dtype)


def _qkv_projection(x2d, wq_t, wk_t, wv_t):
    M, d_in = x2d.shape
    d_out = wq_t.shape[1]
    tm = _pick_tile(M, (512, 256, 128, 64, 32, 16, 8))
    out_sd = jax.ShapeDtypeStruct((M, d_out), jnp.bfloat16)

    # Conservative VMEM estimate (bf16, double-buffered) for the
    # "weights fully resident" plan.
    resident_est = 2 * 2 * (tm * d_in + 3 * d_in * d_out + 3 * tm * d_out)
    budget = 24 * 1024 * 1024  # leave headroom for v7x's smaller VMEM

    if resident_est <= budget:
        # 1-D grid over M tiles; weight block index is constant -> each weight
        # is DMA'd exactly once and stays VMEM-resident.
        grid = (M // tm,)
        in_specs = [
            pl.BlockSpec((tm, d_in), lambda i: (i, 0)),
            pl.BlockSpec((d_in, d_out), lambda i: (0, 0)),
            pl.BlockSpec((d_in, d_out), lambda i: (0, 0)),
            pl.BlockSpec((d_in, d_out), lambda i: (0, 0)),
        ]
        out_specs = [pl.BlockSpec((tm, d_out), lambda i: (i, 0))] * 3
        dims = ("parallel",)
    else:
        # Weights on the OUTER grid axis so each weight tile stays resident
        # across the whole inner M loop (no per-M-tile weight re-fetch).
        tn = _pick_tile(d_out, (512, 256, 128))
        grid = (d_out // tn, M // tm)
        in_specs = [
            pl.BlockSpec((tm, d_in), lambda jn, im: (im, 0)),
            pl.BlockSpec((d_in, tn), lambda jn, im: (0, jn)),
            pl.BlockSpec((d_in, tn), lambda jn, im: (0, jn)),
            pl.BlockSpec((d_in, tn), lambda jn, im: (0, jn)),
        ]
        out_specs = [pl.BlockSpec((tm, tn), lambda jn, im: (im, jn))] * 3
        dims = ("parallel", "parallel")

    return pl.pallas_call(
        _qkv_proj_kernel,
        out_shape=(out_sd, out_sd, out_sd),
        grid_spec=pltpu.PrefetchScalarGridSpec(
            num_scalar_prefetch=0,
            grid=grid,
            in_specs=in_specs,
            out_specs=out_specs,
        ),
        compiler_params=pltpu.CompilerParams(
            dimension_semantics=dims,
            vmem_limit_bytes=_VMEM_LIMIT,
        ),
    )(x2d, wq_t, wk_t, wv_t)


# --------------------------------------------------------------------------
# Stage 2: tiled causal flash attention, all heads per grid step,
#          online softmax in VMEM scratch, causal DMA + mask skipping.
# --------------------------------------------------------------------------
def _flash_kernel(q_ref, k_ref, v_ref, o_ref, m_sc, l_sc, acc_sc,
                  *, num_heads, head_dim, tq, tk):
    qi = pl.program_id(1)
    ki = pl.program_id(2)
    nk = pl.num_programs(2)

    @pl.when(ki == 0)
    def _init():
        m_sc[...] = jnp.full(m_sc.shape, _NEG_INF, dtype=m_sc.dtype)
        l_sc[...] = jnp.zeros(l_sc.shape, dtype=l_sc.dtype)
        acc_sc[...] = jnp.zeros(acc_sc.shape, dtype=acc_sc.dtype)

    def _update(masked):
        q = q_ref[0]  # (tq, H*Dh) bf16, Wq already carries the softmax scale
        k = k_ref[0]  # (tk, H*Dh) bf16
        v = v_ref[0]  # (tk, H*Dh) bf16

        if masked:
            # Diagonal tile (tq == tk and q_start == k_start): the mask is the
            # static local lower triangle — no program_id arithmetic needed.
            row = lax.broadcasted_iota(jnp.int32, (tq, tk), 0)
            col = lax.broadcasted_iota(jnp.int32, (tq, tk), 1)
            keep = col <= row

        for h in range(num_heads):
            lo, hi = h * head_dim, (h + 1) * head_dim
            qh = q[:, lo:hi]                      # (tq, Dh)
            kh = k[:, lo:hi]                      # (tk, Dh)
            vh = v[:, lo:hi]                      # (tk, Dh)

            # QK^T without an explicit transpose: contract last axis of both.
            s = lax.dot_general(qh, kh, (((1,), (1,)), ((), ())),
                                preferred_element_type=jnp.float32)
            if masked:
                s = jnp.where(keep, s, _NEG_INF)

            m_prev = m_sc[h]                      # (tq, 1)
            m_new = jnp.maximum(m_prev, jnp.max(s, axis=-1, keepdims=True))
            alpha = jnp.exp(m_prev - m_new)       # f32 softmax math (v5e-safe)
            p = jnp.exp(s - m_new)

            l_sc[h] = alpha * l_sc[h] + jnp.sum(p, axis=-1, keepdims=True)
            acc_sc[h] = alpha * acc_sc[h] + lax.dot_general(
                p.astype(vh.dtype), vh, (((1,), (0,)), ((), ())),
                preferred_element_type=jnp.float32)
            m_sc[h] = m_new

    # Interior tiles: fully below the diagonal, no mask work at all.
    @pl.when(ki < qi)
    def _interior():
        _update(masked=False)

    # Diagonal tile: apply the local triangular mask.
    @pl.when(ki == qi)
    def _diag():
        _update(masked=True)

    @pl.when(ki == nk - 1)
    def _finalize():
        for h in range(num_heads):
            inv_l = pl.reciprocal(l_sc[h], approx=True)
            lo, hi = h * head_dim, (h + 1) * head_dim
            o_ref[0, :, lo:hi] = (acc_sc[h] * inv_l).astype(o_ref.dtype)


def _flash_attention(q, k, v, *, num_heads, out_dtype):
    """q, k, v: (B, S, d_out) bf16 with heads packed along the last dim."""
    B, S, d_out = q.shape
    head_dim = d_out // num_heads
    tq = _pick_tile(S, (256, 128, 64, 32, 16, 8))
    tk = tq  # causal DMA clamp + tile-skip logic assumes tq == tk
    grid = (B, S // tq, S // tk)

    kernel = functools.partial(_flash_kernel, num_heads=num_heads,
                               head_dim=head_dim, tq=tq, tk=tk)

    # Clamp the kv block index to the q tile index: upper-triangle tiles reuse
    # the previous block index, so Pallas skips their K/V DMAs entirely.
    kv_spec = pl.BlockSpec((1, tk, d_out),
                           lambda b, i, j: (b, jnp.minimum(i, j), 0))

    return pl.pallas_call(
        kernel,
        out_shape=jax.ShapeDtypeStruct((B, S, d_out), out_dtype),
        grid_spec=pltpu.PrefetchScalarGridSpec(
            num_scalar_prefetch=0,
            grid=grid,
            in_specs=[
                pl.BlockSpec((1, tq, d_out), lambda b, i, j: (b, i, 0)),
                kv_spec,
                kv_spec,
            ],
            out_specs=pl.BlockSpec((1, tq, d_out), lambda b, i, j: (b, i, 0)),
            scratch_shapes=[
                pltpu.VMEM((num_heads, tq, 1), jnp.float32),        # running max m
                pltpu.VMEM((num_heads, tq, 1), jnp.float32),        # running sum l
                pltpu.VMEM((num_heads, tq, head_dim), jnp.float32), # output accumulator
            ],
        ),
        compiler_params=pltpu.CompilerParams(
            dimension_semantics=("parallel", "parallel", "arbitrary"),
            vmem_limit_bytes=_VMEM_LIMIT,
        ),
    )(q, k, v)


# --------------------------------------------------------------------------
# Top-level wrapper (matches FlashAttention.forward)
# --------------------------------------------------------------------------
def flash_attention(x, wq_t, wk_t, wv_t, *, num_heads):
    """x: (B, S, d_in); w*_t: (d_in, d_out) (transposed nn.Linear weights)."""
    B, S, d_in = x.shape
    d_out = wq_t.shape[1]
    assert d_out % num_heads == 0
    head_dim = d_out // num_heads
    scale = 1.0 / math.sqrt(head_dim)

    # bf16 MXU operands, f32 accumulation inside the kernels.
    # Softmax scale folded into W_query: O(d_in*d_out) once vs O(S^2) per step.
    xb = x.reshape(B * S, d_in).astype(jnp.bfloat16)
    q2, k2, v2 = _qkv_projection(
        xb,
        (wq_t * scale).astype(jnp.bfloat16),
        wk_t.astype(jnp.bfloat16),
        wv_t.astype(jnp.bfloat16),
    )

    # Free reshapes only — no transposes, no extra HBM passes.
    q = q2.reshape(B, S, d_out)
    k = k2.reshape(B, S, d_out)
    v = v2.reshape(B, S, d_out)

    o = _flash_attention(q, k, v, num_heads=num_heads, out_dtype=x.dtype)
    return o  # already (B, S, d_out)


# --------------------------------------------------------------------------
# Plain-JAX reference (f32) for sanity checking
# --------------------------------------------------------------------------
def _reference(x, wq_t, wk_t, wv_t, *, num_heads):
    B, S, d_in = x.shape
    d_out = wq_t.shape[1]
    head_dim = d_out // num_heads
    q = (x @ wq_t).reshape(B, S, num_heads, head_dim).transpose(0, 2, 1, 3)
    k = (x @ wk_t).reshape(B, S, num_heads, head_dim).transpose(0, 2, 1, 3)
    v = (x @ wv_t).reshape(B, S, num_heads, head_dim).transpose(0, 2, 1, 3)
    s = jnp.einsum("bhqd,bhkd->bhqk", q, k) / math.sqrt(head_dim)
    mask = jnp.tril(jnp.ones((S, S), dtype=bool))
    s = jnp.where(mask, s, -jnp.inf)
    p = jax.nn.softmax(s, axis=-1)
    o = jnp.einsum("bhqk,bhkd->bhqd", p, v)
    return o.transpose(0, 2, 1, 3).reshape(B, S, d_out)


if __name__ == "__main__":
    # Small shapes consistent with the module.
    B, S = 2, 8
    d_in, d_out = 32, 32
    num_heads = 4  # head_dim = 8

    key = jax.random.PRNGKey(0)
    kx, kq, kk, kv = jax.random.split(key, 4)

    x = jax.random.normal(kx, (B, S, d_in), dtype=jnp.float32)

    # Deterministic "Linear" weights (qkv_bias=False), passed pre-transposed
    # as (d_in, d_out) so y = x @ W_t.
    bound = 1.0 / math.sqrt(d_in)
    wq_t = jax.random.uniform(kq, (d_in, d_out), jnp.float32, -bound, bound)
    wk_t = jax.random.uniform(kk, (d_in, d_out), jnp.float32, -bound, bound)
    wv_t = jax.random.uniform(kv, (d_in, d_out), jnp.float32, -bound, bound)

    out = flash_attention(x, wq_t, wk_t, wv_t, num_heads=num_heads)
    out = jax.block_until_ready(out)

    ref = _reference(x, wq_t, wk_t, wv_t, num_heads=num_heads)
    assert out.shape == (B, S, d_out)
    # bf16 MXU operands -> loosened tolerance vs the f32 reference.
    assert jnp.allclose(out, ref, atol=3e-2, rtol=3e-2), "mismatch vs reference"

    print("KERNEL_OK")
</pallas_src>

<mosaic_0001>
module attributes {stable_mosaic.version = 11 : i64} {
  func.func @_qkv_proj_kernel(%arg0: i32, %arg1: memref<16x32xbf16, #tpu.memory_space<vmem>>, %arg2: memref<32x32xbf16, #tpu.memory_space<vmem>>, %arg3: memref<32x32xbf16, #tpu.memory_space<vmem>>, %arg4: memref<32x32xbf16, #tpu.memory_space<vmem>>, %arg5: memref<16x32xbf16, #tpu.memory_space<vmem>>, %arg6: memref<16x32xbf16, #tpu.memory_space<vmem>>, %arg7: memref<16x32xbf16, #tpu.memory_space<vmem>>) attributes {dimension_semantics = [#tpu.dimension_semantics<parallel>], iteration_bounds = array<i64: 1>, scalar_prefetch = 0 : i64, scratch_operands = 0 : i64, tpu.core_type = #tpu.core_type<tc>, window_params = [{transform_indices = @transform_0, window_bounds = array<i64: 16, 32>}, {pipeline_mode = #tpu.pipeline_mode<synchronous>, transform_indices = @transform_1, window_bounds = array<i64: 32, 32>}, {pipeline_mode = #tpu.pipeline_mode<synchronous>, transform_indices = @transform_2, window_bounds = array<i64: 32, 32>}, {pipeline_mode = #tpu.pipeline_mode<synchronous>, transform_indices = @transform_3, window_bounds = array<i64: 32, 32>}, {transform_indices = @transform_4, window_bounds = array<i64: 16, 32>}, {transform_indices = @transform_5, window_bounds = array<i64: 16, 32>}, {transform_indices = @transform_6, window_bounds = array<i64: 16, 32>}]} {
    %c0 = arith.constant 0 : index
    %c0_0 = arith.constant 0 : index
    %0 = vector.load %arg1[%c0, %c0_0] : memref<16x32xbf16, #tpu.memory_space<vmem>>, vector<16x32xbf16>
    %c0_1 = arith.constant 0 : index
    %c0_2 = arith.constant 0 : index
    %1 = vector.load %arg2[%c0_1, %c0_2] : memref<32x32xbf16, #tpu.memory_space<vmem>>, vector<32x32xbf16>
    %cst = arith.constant dense<0.000000e+00> : vector<16x32xf32>
    %2 = tpu.matmul %0, %1, %cst {dimension_numbers = #tpu.dot_dimension_numbers<[1], [0], [0], [1], [0, 0, 1, 1], [], []>} : vector<16x32xbf16>, vector<32x32xbf16>, vector<16x32xf32> -> vector<16x32xf32>
    %3 = arith.truncf %2 : vector<16x32xf32> to vector<16x32xbf16>
    %c0_3 = arith.constant 0 : index
    %c0_4 = arith.constant 0 : index
    %4 = vector.load %arg5[%c0_3, %c0_4] : memref<16x32xbf16, #tpu.memory_space<vmem>>, vector<16x32xbf16>
    tpu.vector_store %arg5[%c0_3, %c0_4], %3 {strides = array<i32>} : memref<16x32xbf16, #tpu.memory_space<vmem>>, vector<16x32xbf16>,
    %c0_5 = arith.constant 0 : index
    %c0_6 = arith.constant 0 : index
    %5 = vector.load %arg3[%c0_5, %c0_6] : memref<32x32xbf16, #tpu.memory_space<vmem>>, vector<32x32xbf16>
    %cst_7 = arith.constant dense<0.000000e+00> : vector<16x32xf32>
    %6 = tpu.matmul %0, %5, %cst_7 {dimension_numbers = #tpu.dot_dimension_numbers<[1], [0], [0], [1], [0, 0, 1, 1], [], []>} : vector<16x32xbf16>, vector<32x32xbf16>, vector<16x32xf32> -> vector<16x32xf32>
    %7 = arith.truncf %6 : vector<16x32xf32> to vector<16x32xbf16>
    %c0_8 = arith.constant 0 : index
    %c0_9 = arith.constant 0 : index
    %8 = vector.load %arg6[%c0_8, %c0_9] : memref<16x32xbf16, #tpu.memory_space<vmem>>, vector<16x32xbf16>
    tpu.vector_store %arg6[%c0_8, %c0_9], %7 {strides = array<i32>} : memref<16x32xbf16, #tpu.memory_space<vmem>>, vector<16x32xbf16>,
    %c0_10 = arith.constant 0 : index
    %c0_11 = arith.constant 0 : index
    %9 = vector.load %arg4[%c0_10, %c0_11] : memref<32x32xbf16, #tpu.memory_space<vmem>>, vector<32x32xbf16>
    %cst_12 = arith.constant dense<0.000000e+00> : vector<16x32xf32>
    %10 = tpu.matmul %0, %9, %cst_12 {dimension_numbers = #tpu.dot_dimension_numbers<[1], [0], [0], [1], [0, 0, 1, 1], [], []>} : vector<16x32xbf16>, vector<32x32xbf16>, vector<16x32xf32> -> vector<16x32xf32>
    %11 = arith.truncf %10 : vector<16x32xf32> to vector<16x32xbf16>
    %c0_13 = arith.constant 0 : index
    %c0_14 = arith.constant 0 : index
    %12 = vector.load %arg7[%c0_13, %c0_14] : memref<16x32xbf16, #tpu.memory_space<vmem>>, vector<16x32xbf16>
    tpu.vector_store %arg7[%c0_13, %c0_14], %11 {strides = array<i32>} : memref<16x32xbf16, #tpu.memory_space<vmem>>, vector<16x32xbf16>,
    return
  }
  func.func @transform_0(%arg0: i32) -> (i32, i32) {
    %c0_i32 = arith.constant 0 : i32
    %c0_i32_0 = arith.constant 0 : i32
    return %arg0, %c0_i32 : i32, i32
  }
  func.func @transform_1(%arg0: i32) -> (i32, i32) {
    %c0_i32 = arith.constant 0 : i32
    %c0_i32_0 = arith.constant 0 : i32
    %c0_i32_1 = arith.constant 0 : i32
    return %c0_i32, %c0_i32_0 : i32, i32
  }
  func.func @transform_2(%arg0: i32) -> (i32, i32) {
    %c0_i32 = arith.constant 0 : i32
    %c0_i32_0 = arith.constant 0 : i32
    %c0_i32_1 = arith.constant 0 : i32
    return %c0_i32, %c0_i32_0 : i32, i32
  }
  func.func @transform_3(%arg0: i32) -> (i32, i32) {
    %c0_i32 = arith.constant 0 : i32
    %c0_i32_0 = arith.constant 0 : i32
    %c0_i32_1 = arith.constant 0 : i32
    return %c0_i32, %c0_i32_0 : i32, i32
  }
  func.func @transform_4(%arg0: i32) -> (i32, i32) {
    %c0_i32 = arith.constant 0 : i32
    %c0_i32_0 = arith.constant 0 : i32
    return %arg0, %c0_i32 : i32, i32
  }
  func.func @transform_5(%arg0: i32) -> (i32, i32) {
    %c0_i32 = arith.constant 0 : i32
    %c0_i32_0 = arith.constant 0 : i32
    return %arg0, %c0_i32 : i32, i32
  }
  func.func @transform_6(%arg0: i32) -> (i32, i32) {
    %c0_i32 = arith.constant 0 : i32
    %c0_i32_0 = arith.constant 0 : i32
    return %arg0, %c0_i32 : i32, i32
  }
}

</mosaic_0001>

<llo_original>
// kernel: tpu_custom_call.1
$region0: #{tpu_custom_call.1}
  #allocation0 [shape = 'u32[]', space=smem, size = 0x4, offset = 0x4, fixed_abs, tag = 'smem constant byte address 0x4 - core index']
  #allocation1 [shape = 'u32[72,128]{1,0:T(1,128)}', space=vmem, size = 0x9000, scoped, tag = 'internal scratch']
  %s0 = inlined_call_operand.hbm [shape: bf16[16,32], index: 0, kind: input, shape index: {}]
  %s1 = inlined_call_operand.hbm [shape: bf16[32,32], index: 1, kind: input, shape index: {}]
  %s2 = inlined_call_operand.hbm [shape: bf16[32,32], index: 2, kind: input, shape index: {}]
  %s3 = inlined_call_operand.hbm [shape: bf16[32,32], index: 3, kind: input, shape index: {}]
  %s4 = inlined_call_operand.hbm [shape: bf16[16,32], index: 4, kind: output, shape index: {0}]
  %s5 = inlined_call_operand.hbm [shape: bf16[16,32], index: 5, kind: output, shape index: {1}]
  %s6 = inlined_call_operand.hbm [shape: bf16[16,32], index: 6, kind: output, shape index: {2}]
  %7 = xla_tuple %s4, %s5, %s6
  %s8 = sld [smem:[#allocation0]]
  $region58: #{tpu_custom_call.1} parent=0
    _
  %s10 = ssub.s32 1, %s8
  %s11 = scalar_select 0, %s10, %s8
  $region1: #{tpu_custom_call.1} parent=0
    #allocation2 [shape = 'u8[4096]{0}', space=vmem, size = 0x1000, scoped, tag = 'input window, operand 0, single buffered']
    #allocation3 [shape = 's32[1]{0}', space=sflag, size = 0x4, scoped, tag = 'scoped memory for tpu_custom_call.1']
    #allocation4 [shape = 's32[1]{0}', space=sflag, size = 0x4, scoped, tag = 'scoped memory for tpu_custom_call.1']
    #allocation5 [shape = 'u8[8192]{0}', space=vmem, size = 0x2000, scoped, tag = 'input window, operand 1, single buffered']
    #allocation6 [shape = 's32[1]{0}', space=sflag, size = 0x4, scoped, tag = 'scoped memory for tpu_custom_call.1']
    #allocation7 [shape = 'u8[8192]{0}', space=vmem, size = 0x2000, scoped, tag = 'input window, operand 2, single buffered']
    #allocation8 [shape = 'u8[8192]{0}', space=vmem, size = 0x2000, scoped, tag = 'input window, operand 3, single buffered']
    #allocation9 [shape = 's32[1]{0}', space=sflag, size = 0x4, scoped, tag = 'scoped memory for tpu_custom_call.1']
    #allocation10 [shape = 'u8[4096]{0}', space=vmem, size = 0x1000, scoped, tag = 'output window, operand 0, single buffered']
    #allocation11 [shape = 'u8[4096]{0}', space=vmem, size = 0x1000, scoped, tag = 'output window, operand 1, single buffered']
    #allocation12 [shape = 's32[1]{0}', space=sflag, size = 0x4, scoped, tag = 'scoped memory for tpu_custom_call.1']
    #allocation13 [shape = 'u8[4096]{0}', space=vmem, size = 0x1000, scoped, tag = 'output window, operand 2, single buffered']
    %12 = vsyncpa [#allocation3], 0
    %13 = vsyncpa [#allocation6], 0
    %14 = vsyncpa [#allocation9], 0
    %15 = vsyncpa [#allocation4], 0
    %16 = vsyncpa [#allocation12], 0
    // Predicated region
    $region2: #{tpu_custom_call.1} parent=1 // pred_check
      _
    $region3: #{tpu_custom_call.1} parent=1 // pred_check_branch
      %18 = sbr.rel (0) target = $region5
    $region4: #{tpu_custom_call.1} parent=1 // pred_region
      %20 = vsyncadd [#allocation3], 0
      %s21 = sshll.u32 %s0, 4
      %s22 = int_to_ptr.hbm [resolvable:$true] %s21
      %s23 = sshll.u32 [#allocation2], 4
      %s24 = int_to_ptr.vmem [resolvable:$true] %s23
      %29 = dma.hbm_to_vmem [thread:$0]  %s22, 128, %s24, [#allocation3], 64, 64, 4
    $region5: #{tpu_custom_call.1} parent=1 // pred_fallthru
      _
    // Predicated region
    $region6: #{tpu_custom_call.1} parent=1 // pred_check
      _
    $region7: #{tpu_custom_call.1} parent=1 // pred_check_branch
      %31 = sbr.rel (0) target = $region9
    $region8: #{tpu_custom_call.1} parent=1 // pred_region
      %33 = vsyncadd [#allocation6], 0
      %s34 = sshll.u32 %s1, 4
      %s35 = int_to_ptr.hbm [resolvable:$true] %s34
      %s36 = sshll.u32 [#allocation5], 4
      %s37 = int_to_ptr.vmem [resolvable:$true] %s36
      %42 = dma.hbm_to_vmem [thread:$0]  %s35, 256, %s37, [#allocation6], 64, 64, 4
    $region9: #{tpu_custom_call.1} parent=1 // pred_fallthru
      _
    // Predicated region
    $region10: #{tpu_custom_call.1} parent=1 // pred_check
      _
    $region11: #{tpu_custom_call.1} parent=1 // pred_check_branch
      %44 = sbr.rel (0) target = $region13
    $region12: #{tpu_custom_call.1} parent=1 // pred_region
      %46 = vsyncadd [#allocation6], 0
      %s47 = sshll.u32 %s2, 4
      %s48 = int_to_ptr.hbm [resolvable:$true] %s47
      %s49 = sshll.u32 [#allocation7], 4
      %s50 = int_to_ptr.vmem [resolvable:$true] %s49
      %55 = dma.hbm_to_vmem [thread:$0]  %s48, 256, %s50, [#allocation6], 64, 64, 4
    $region13: #{tpu_custom_call.1} parent=1 // pred_fallthru
      _
    // Predicated region
    $region14: #{tpu_custom_call.1} parent=1 // pred_check
      _
    $region15: #{tpu_custom_call.1} parent=1 // pred_check_branch
      %57 = sbr.rel (0) target = $region17
    $region16: #{tpu_custom_call.1} parent=1 // pred_region
      %59 = vsyncadd [#allocation9], 0
      %s60 = sshll.u32 %s3, 4
      %s61 = int_to_ptr.hbm [resolvable:$true] %s60
      %s62 = sshll.u32 [#allocation8], 4
      %s63 = int_to_ptr.vmem [resolvable:$true] %s62
      %68 = dma.hbm_to_vmem [thread:$0]  %s61, 256, %s63, [#allocation9], 64, 64, 4
    $region17: #{tpu_custom_call.1} parent=1 // pred_fallthru
      _
    // Predicated region
    $region18: #{tpu_custom_call.1} parent=1 // pred_check
      _
    $region19: #{tpu_custom_call.1} parent=1 // pred_check_branch
      %70 = sbr.rel (0) target = $region21
    $region20: #{tpu_custom_call.1} parent=1 // pred_region
      %72 = dma.done [#allocation3], 128
    $region21: #{tpu_custom_call.1} parent=1 // pred_fallthru
      _
    // Predicated region
    $region22: #{tpu_custom_call.1} parent=1 // pred_check
      _
    $region23: #{tpu_custom_call.1} parent=1 // pred_check_branch
      %74 = sbr.rel (0) target = $region25
    $region24: #{tpu_custom_call.1} parent=1 // pred_region
      %76 = dma.done [#allocation6], 256
    $region25: #{tpu_custom_call.1} parent=1 // pred_fallthru
      _
    // Predicated region
    $region26: #{tpu_custom_call.1} parent=1 // pred_check
      _
    $region27: #{tpu_custom_call.1} parent=1 // pred_check_branch
      %78 = sbr.rel (0) target = $region29
    $region28: #{tpu_custom_call.1} parent=1 // pred_region
      %80 = dma.done [#allocation6], 256
    $region29: #{tpu_custom_call.1} parent=1 // pred_fallthru
      _
    // Predicated region
    $region30: #{tpu_custom_call.1} parent=1 // pred_check
      _
    $region31: #{tpu_custom_call.1} parent=1 // pred_check_branch
      %82 = sbr.rel (0) target = $region33
    $region32: #{tpu_custom_call.1} parent=1 // pred_region
      %84 = dma.done [#allocation9], 256
    $region33: #{tpu_custom_call.1} parent=1 // pred_fallthru
      _
    %v86 = vld [vmem:[#allocation2] sm:$0xf]
    %v87 = vld [vmem:[#allocation2 + $0x4] sm:$0xf]
    %v88 = vld [vmem:[#allocation5] sm:$0xf]
    %v89 = vld [vmem:[#allocation5 + $0x4] sm:$0xf]
    %v90 = vld [vmem:[#allocation5 + $0x8] sm:$0xf]
    %v91 = vld [vmem:[#allocation5 + $0xc] sm:$0xf]
    %v94 = vunpack.c.l.b16 %v86
    %v95 = vunpack.c.l.b16 %v87
    %v96 = vpack.c.b16 %v95, %v94
    %v101 = vunpack.c.l.b16 %v88
    %v102 = vunpack.c.l.b16 %v89
    %v103 = vunpack.c.l.b16 %v90
    %v104 = vunpack.c.l.b16 %v91
    %v105 = vpack.c.b16 %v102, %v101
    %v106 = vpack.c.b16 %v104, %v103
    %vm109 = vcmask 261120
    %v111 = vsel %vm109, %v96, 0
    %113 = vmatpush.bf16.msra.mxu0 0
    %114 = vmatpush.bf16.msra.mxu0 0
    %115 = vmatpush.bf16.msra.mxu0 0
    %116 = vmatpush.bf16.msra.mxu0 0
    %117 = vmatpush.bf16.msra.mxu0 0
    %118 = vmatpush.bf16.msra.mxu0 0
    %119 = vmatpush.bf16.msra.mxu0 %v106
    %120 = vmatpush.bf16.msra.mxu0 %v105
    %121 = vmatmul.bf16.gmra.mxu0 %v111
    %v122 = vpop.f32.mrf.mxu0
    %v123 = vadd.f32 0.0, %v122
    %v124 = vpop.f32.mrf.mxu0
    %v125 = vadd.f32 0.0, %v124
    %126 = vdwg.mxu0
    %v127 = vpack.c.bf16 %v123, %v123
    %v128 = vpack.c.bf16 %v125, %v125
    %vm129 = vcmask 257024
    %130 = vst.msk [vmem:[#allocation10] sm:$0xf] %vm129, %v127
    %131 = vst.msk [vmem:[#allocation10 + $0x4] sm:$0xf] %vm129, %v128
    %v132 = vld [vmem:[#allocation7] sm:$0xf]
    %v133 = vld [vmem:[#allocation7 + $0x4] sm:$0xf]
    %v134 = vld [vmem:[#allocation7 + $0x8] sm:$0xf]
    %v135 = vld [vmem:[#allocation7 + $0xc] sm:$0xf]
    %v140 = vunpack.c.l.b16 %v132
    %v141 = vunpack.c.l.b16 %v133
    %v142 = vunpack.c.l.b16 %v134
    %v143 = vunpack.c.l.b16 %v135
    %v144 = vpack.c.b16 %v141, %v140
    %v145 = vpack.c.b16 %v143, %v142
    %148 = vmatpush.bf16.msra.mxu0 0
    %149 = vmatpush.bf16.msra.mxu0 0
    %150 = vmatpush.bf16.msra.mxu0 0
    %151 = vmatpush.bf16.msra.mxu0 0
    %152 = vmatpush.bf16.msra.mxu0 0
    %153 = vmatpush.bf16.msra.mxu0 0
    %154 = vmatpush.bf16.msra.mxu0 %v145
    %155 = vmatpush.bf16.msra.mxu0 %v144
    %156 = vmatmul.bf16.gmra.mxu0 %v111
    %v157 = vpop.f32.mrf.mxu0
    %v158 = vadd.f32 0.0, %v157
    %v159 = vpop.f32.mrf.mxu0
    %v160 = vadd.f32 0.0, %v159
    %161 = vdwg.mxu0
    %v162 = vpack.c.bf16 %v158, %v158
    %v163 = vpack.c.bf16 %v160, %v160
    %164 = vst.msk [vmem:[#allocation11] sm:$0xf] %vm129, %v162
    %165 = vst.msk [vmem:[#allocation11 + $0x4] sm:$0xf] %vm129, %v163
    %v166 = vld [vmem:[#allocation8] sm:$0xf]
    %v167 = vld [vmem:[#allocation8 + $0x4] sm:$0xf]
    %v168 = vld [vmem:[#allocation8 + $0x8] sm:$0xf]
    %v169 = vld [vmem:[#allocation8 + $0xc] sm:$0xf]
    %v174 = vunpack.c.l.b16 %v166
    %v175 = vunpack.c.l.b16 %v167
    %v176 = vunpack.c.l.b16 %v168
    %v177 = vunpack.c.l.b16 %v169
    %v178 = vpack.c.b16 %v175, %v174
    %v179 = vpack.c.b16 %v177, %v176
    %182 = vmatpush.bf16.msra.mxu0 0
    %183 = vmatpush.bf16.msra.mxu0 0
    %184 = vmatpush.bf16.msra.mxu0 0
    %185 = vmatpush.bf16.msra.mxu0 0
    %186 = vmatpush.bf16.msra.mxu0 0
    %187 = vmatpush.bf16.msra.mxu0 0
    %188 = vmatpush.bf16.msra.mxu0 %v179
    %189 = vmatpush.bf16.msra.mxu0 %v178
    %190 = vmatmul.bf16.gmra.mxu0 %v111
    %v191 = vpop.f32.mrf.mxu0
    %v192 = vadd.f32 0.0, %v191
    %v193 = vpop.f32.mrf.mxu0
    %v194 = vadd.f32 0.0, %v193
    %195 = vdwg.mxu0
    %v196 = vpack.c.bf16 %v192, %v192
    %v197 = vpack.c.bf16 %v194, %v194
    %198 = vst.msk [vmem:[#allocation13] sm:$0xf] %vm129, %v196
    %199 = vst.msk [vmem:[#allocation13 + $0x4] sm:$0xf] %vm129, %v197
    // Predicated region
    $region34: #{tpu_custom_call.1} parent=1 // pred_check
      _
    $region35: #{tpu_custom_call.1} parent=1 // pred_check_branch
      %201 = sbr.rel (0) target = $region37
    $region36: #{tpu_custom_call.1} parent=1 // pred_region
      %203 = vsyncadd [#allocation4], 0
      %s204 = sshll.u32 [#allocation10], 4
      %s205 = int_to_ptr.vmem [resolvable:$true] %s204
      %s206 = sshll.u32 %s4, 4
      %s207 = int_to_ptr.hbm [resolvable:$true] %s206
      %212 = dma.vmem_to_hbm [thread:$0]  %s205, 128, %s207, [#allocation4], 64, 64, 4
    $region37: #{tpu_custom_call.1} parent=1 // pred_fallthru
      _
    // Predicated region
    $region38: #{tpu_custom_call.1} parent=1 // pred_check
      _
    $region39: #{tpu_custom_call.1} parent=1 // pred_check_branch
      %214 = sbr.rel (0) target = $region41
    $region40: #{tpu_custom_call.1} parent=1 // pred_region
      %216 = vsyncadd [#allocation12], 0
      %s217 = sshll.u32 [#allocation11], 4
      %s218 = int_to_ptr.vmem [resolvable:$true] %s217
      %s219 = sshll.u32 %s5, 4
      %s220 = int_to_ptr.hbm [resolvable:$true] %s219
      %225 = dma.vmem_to_hbm [thread:$0]  %s218, 128, %s220, [#allocation12], 64, 64, 4
    $region41: #{tpu_custom_call.1} parent=1 // pred_fallthru
      _
    // Predicated region
    $region42: #{tpu_custom_call.1} parent=1 // pred_check
      _
    $region43: #{tpu_custom_call.1} parent=1 // pred_check_branch
      %227 = sbr.rel (0) target = $region45
    $region44: #{tpu_custom_call.1} parent=1 // pred_region
      %229 = vsyncadd [#allocation12], 0
      %s230 = sshll.u32 [#allocation13], 4
      %s231 = int_to_ptr.vmem [resolvable:$true] %s230
      %s232 = sshll.u32 %s6, 4
      %s233 = int_to_ptr.hbm [resolvable:$true] %s232
      %238 = dma.vmem_to_hbm [thread:$0]  %s231, 128, %s233, [#allocation12], 64, 64, 4
    $region45: #{tpu_custom_call.1} parent=1 // pred_fallthru
      _
    // Predicated region
    $region46: #{tpu_custom_call.1} parent=1 // pred_check
      _
    $region47: #{tpu_custom_call.1} parent=1 // pred_check_branch
      %240 = sbr.rel (0) target = $region49
    $region48: #{tpu_custom_call.1} parent=1 // pred_region
      %242 = dma.done [#allocation4], 128
    $region49: #{tpu_custom_call.1} parent=1 // pred_fallthru
      _
    // Predicated region
    $region50: #{tpu_custom_call.1} parent=1 // pred_check
      _
    $region51: #{tpu_custom_call.1} parent=1 // pred_check_branch
      %244 = sbr.rel (0) target = $region53
    $region52: #{tpu_custom_call.1} parent=1 // pred_region
      %246 = dma.done [#allocation12], 128
    $region53: #{tpu_custom_call.1} parent=1 // pred_fallthru
      _
    // Predicated region
    $region54: #{tpu_custom_call.1} parent=1 // pred_check
      _
    $region55: #{tpu_custom_call.1} parent=1 // pred_check_branch
      %248 = sbr.rel (0) target = $region57
    $region56: #{tpu_custom_call.1} parent=1 // pred_region
      %250 = dma.done [#allocation12], 128
    $region57: #{tpu_custom_call.1} parent=1 // pred_fallthru
      _
    %251 = vsyncpa [#allocation3], 1
    %252 = vsyncpa [#allocation6], 1
    %253 = vsyncpa [#allocation9], 1
    %254 = vsyncpa [#allocation4], 1
    %255 = vsyncpa [#allocation12], 1

</llo_original>
